<compile_context>
chip_gen: v6e
topology: v6e:2x2x1
jax: 0.10.0
libtpu: 0.0.40
codegen_flags: <defaults>
</compile_context>

<pallas_src>
import jax
import jax.numpy as jnp
from jax.experimental import pallas as pl
from jax.experimental.pallas import tpu as pltpu

_LANES = 128
_MAX_TR = 4096                         # hard cap on the row tile (sublane rows)
_VMEM_INPUT_BUDGET = 16 * 1024 * 1024  # bytes for 2 inputs x 2 pipeline buffers
_VMEM_LIMIT = 48 * 1024 * 1024         # scoped VMEM limit (ok on v5e/v6e/v7x)


def _make_kernel(tr, rows, rsteps, needs_mask):
    def kernel(pred_ref, true_ref, inter_ref, total_ref):
        # pred_ref/true_ref: (C, TR, 128) view of one (batch, row-split) tile.
        # inter_ref/total_ref: (C, 128) per-class partials, resident across r.
        s = pl.program_id(1)
        r = pl.program_id(2)

        p = pred_ref[...].astype(jnp.float32)
        t = true_ref[...].astype(jnp.float32)

        if needs_mask:
            # Tail block: zero sublane rows past the true row extent. Also
            # handles fully out-of-range blocks of an uneven TensorCore split
            # (valid <= 0 -> everything masked).
            row_start = (s * rsteps + r) * tr
            valid = rows - row_start
            row_ids = jax.lax.broadcasted_iota(jnp.int32, p.shape, 1)
            keep = row_ids < valid
            zero = jnp.float32(0.0)
            p = jnp.where(keep, p, zero)
            t = jnp.where(keep, t, zero)

        inter_part = jnp.sum(t * p, axis=1)   # (C, 128): sublane reduce only
        total_part = jnp.sum(t + p, axis=1)   # lane reduce deferred to wrapper

        @pl.when(r == 0)
        def _():
            inter_ref[...] = jnp.zeros_like(inter_ref)
            total_ref[...] = jnp.zeros_like(total_ref)

        inter_ref[...] += inter_part
        total_ref[...] += total_part

    return kernel


def mean_iou(outputs, targets, smooth, *, max_tr=None):
    """outputs, targets: (N, C, H, W). Returns scalar mean IoU."""
    N, C, H, W = outputs.shape
    assert targets.shape == outputs.shape
    HW = H * W

    # Free reshapes -- no transpose, no dtype cast, no HBM round trip.
    pred = outputs.reshape(N, C, HW)
    true = targets.reshape(N, C, HW)

    rows = -(-HW // _LANES)            # ceil(HW / 128)
    hw_pad = rows * _LANES
    if hw_pad != HW:
        # Lane padding only (HW not a multiple of 128). Exact zeros: adds
        # nothing to intersection or total.
        pred = jnp.pad(pred, ((0, 0), (0, 0), (0, hw_pad - HW)))
        true = jnp.pad(true, ((0, 0), (0, 0), (0, hw_pad - HW)))
    pred = pred.reshape(N, C, rows, _LANES)
    true = true.reshape(N, C, rows, _LANES)

    p_item = jnp.dtype(pred.dtype).itemsize
    t_item = jnp.dtype(true.dtype).itemsize
    # Sublane packing requirement of the most narrowly-packed input:
    # f32 -> 8, bf16 -> 16, int8/bool -> 32.
    sub_mult = max(8, 32 // max(1, p_item), 32 // max(1, t_item))

    # Largest row tile whose double-buffered input working set fits the budget.
    bytes_per_row = C * _LANES * (p_item + t_item)      # one sublane row, both inputs
    cap = _VMEM_INPUT_BUDGET // (2 * bytes_per_row)     # 2 = double buffering
    cap = min(cap, _MAX_TR if max_tr is None else max_tr)
    cap = max(sub_mult, (cap // sub_mult) * sub_mult)
    # TODO(synk): for very large C (>= ~64) tile C on a parallel grid axis
    # instead of letting TR shrink (keeps per-class DMA runs large).

    if rows <= cap:
        tr = rows                      # single r-step; full-extent block is legal
        n_blocks = 1
    else:
        tr = cap                       # multiple of sub_mult
        n_blocks = -(-rows // tr)

    # 2-way row split so both v7x TensorCores stream when N alone can't balance.
    split = 2 if (N % 2 == 1 and n_blocks >= 2) else 1
    rsteps = -(-n_blocks // split)
    needs_mask = split * rsteps * tr > rows
    needs_clamp = split * rsteps > n_blocks

    def in_index_map(n, s, r):
        blk = s * rsteps + r
        if needs_clamp:
            # Fully out-of-range blocks of an uneven split re-read the last
            # valid block; the in-kernel mask zeroes their contribution.
            blk = jnp.minimum(blk, n_blocks - 1)
        return (n, 0, blk, 0)

    kernel = _make_kernel(tr, rows, rsteps, needs_mask)

    inter, total = pl.pallas_call(
        kernel,
        out_shape=(
            jax.ShapeDtypeStruct((N, split, C, _LANES), jnp.float32),
            jax.ShapeDtypeStruct((N, split, C, _LANES), jnp.float32),
        ),
        grid_spec=pltpu.PrefetchScalarGridSpec(
            num_scalar_prefetch=0,
            grid=(N, split, rsteps),
            in_specs=[
                pl.BlockSpec((None, C, tr, _LANES), in_index_map),
                pl.BlockSpec((None, C, tr, _LANES), in_index_map),
            ],
            out_specs=(
                pl.BlockSpec((None, None, C, _LANES), lambda n, s, r: (n, s, 0, 0)),
                pl.BlockSpec((None, None, C, _LANES), lambda n, s, r: (n, s, 0, 0)),
            ),
        ),
        compiler_params=pltpu.CompilerParams(
            dimension_semantics=("parallel", "parallel", "arbitrary"),
            vmem_limit_bytes=_VMEM_LIMIT,
        ),
    )(pred, true)

    # Tiny epilogue in plain JAX: reduce batch/split/lanes, per-class IoU, mean.
    smooth = jnp.float32(smooth)
    inter_c = jnp.sum(inter, axis=(0, 1, 3))        # (C,)
    total_c = jnp.sum(total, axis=(0, 1, 3))        # (C,)
    union_c = total_c - inter_c
    iou = (inter_c + smooth) / (union_c + smooth)
    return jnp.sum(iou) / jnp.float32(C)


def _reference_mean_iou(outputs, targets, smooth):
    """Pure-JAX reference mirroring the PyTorch module."""
    C = outputs.shape[1]
    score = 0.0
    for c in range(C):
        t = targets[:, c, :, :].reshape(-1).astype(jnp.float32)
        p = outputs[:, c, :, :].reshape(-1).astype(jnp.float32)
        inter = jnp.sum(t * p)
        total = jnp.sum(t + p)
        union = total - inter
        score = score + (inter + smooth) / (union + smooth)
    return score / C


if __name__ == "__main__":
    smooth = 1.0

    # Primary example: batch=2, classes=4, 16x16 spatial.
    k1, k2 = jax.random.split(jax.random.PRNGKey(0))
    outputs = jax.nn.sigmoid(jax.random.normal(k1, (2, 4, 16, 16), jnp.float32))
    targets = (jax.random.uniform(k2, (2, 4, 16, 16)) > 0.5).astype(jnp.float32)

    result = jax.block_until_ready(mean_iou(outputs, targets, smooth))
    expected = _reference_mean_iou(outputs, targets, smooth)
    assert jnp.allclose(result, expected, rtol=1e-4, atol=1e-5), (result, expected)

    # Small extra checks covering tail-mask / uneven TC-split / lane-pad / bf16
    # tiling paths (max_tr override forces multi-block tiling at small shapes).
    extra_cases = [
        ((1, 3, 48, 48), jnp.float32, 8),     # tail mask + clamped 2-way row split
        ((2, 5, 10, 13), jnp.float32, None),  # lane padding (HW % 128 != 0)
        ((1, 2, 64, 64), jnp.bfloat16, 16),   # bf16 (16,128) sublane packing
    ]
    for i, (shape, dt, mtr) in enumerate(extra_cases):
        ka, kb = jax.random.split(jax.random.PRNGKey(i + 1))
        o = jax.nn.sigmoid(jax.random.normal(ka, shape, jnp.float32)).astype(dt)
        t = (jax.random.uniform(kb, shape) > 0.5).astype(dt)
        got = jax.block_until_ready(mean_iou(o, t, smooth, max_tr=mtr))
        want = _reference_mean_iou(o, t, smooth)
        assert jnp.allclose(got, want, rtol=1e-4, atol=1e-5), (shape, got, want)

    print("KERNEL_OK")
</pallas_src>

<mosaic_0001>
module attributes {stable_mosaic.version = 11 : i64} {
  func.func @kernel(%arg0: i32, %arg1: i32, %arg2: i32, %arg3: memref<1x4x2x128xf32, #tpu.memory_space<vmem>>, %arg4: memref<1x4x2x128xf32, #tpu.memory_space<vmem>>, %arg5: memref<1x1x4x128xf32, #tpu.memory_space<vmem>>, %arg6: memref<1x1x4x128xf32, #tpu.memory_space<vmem>>) attributes {dimension_semantics = [#tpu.dimension_semantics<parallel>, #tpu.dimension_semantics<parallel>, #tpu.dimension_semantics<arbitrary>], iteration_bounds = array<i64: 2, 1, 1>, scalar_prefetch = 0 : i64, scratch_operands = 0 : i64, tpu.core_type = #tpu.core_type<tc>, window_params = [{transform_indices = @transform_0, window_bounds = array<i64: 1, 4, 2, 128>}, {transform_indices = @transform_1, window_bounds = array<i64: 1, 4, 2, 128>}, {transform_indices = @transform_2, window_bounds = array<i64: 1, 1, 4, 128>}, {transform_indices = @transform_3, window_bounds = array<i64: 1, 1, 4, 128>}]} {
    %c0 = arith.constant 0 : index
    %c0_0 = arith.constant 0 : index
    %c0_1 = arith.constant 0 : index
    %c0_2 = arith.constant 0 : index
    %0 = vector.load %arg3[%c0, %c0_0, %c0_1, %c0_2] : memref<1x4x2x128xf32, #tpu.memory_space<vmem>>, vector<1x4x2x128xf32>
    %1 = vector.shape_cast %0 : vector<1x4x2x128xf32> to vector<4x2x128xf32>
    %c0_3 = arith.constant 0 : index
    %c0_4 = arith.constant 0 : index
    %c0_5 = arith.constant 0 : index
    %c0_6 = arith.constant 0 : index
    %2 = vector.load %arg4[%c0_3, %c0_4, %c0_5, %c0_6] : memref<1x4x2x128xf32, #tpu.memory_space<vmem>>, vector<1x4x2x128xf32>
    %3 = vector.shape_cast %2 : vector<1x4x2x128xf32> to vector<4x2x128xf32>
    %4 = arith.mulf %3, %1 : vector<4x2x128xf32>
    %cst = arith.constant dense<0.000000e+00> : vector<4x128xf32>
    %5 = vector.multi_reduction <add>, %4, %cst [1] : vector<4x2x128xf32> to vector<4x128xf32>
    %6 = arith.addf %3, %1 : vector<4x2x128xf32>
    %cst_7 = arith.constant dense<0.000000e+00> : vector<4x128xf32>
    %7 = vector.multi_reduction <add>, %6, %cst_7 [1] : vector<4x2x128xf32> to vector<4x128xf32>
    %c0_i32 = arith.constant 0 : i32
    %8 = arith.cmpi eq, %arg2, %c0_i32 : i32
    %9 = arith.extui %8 : i1 to i32
    %c0_i32_8 = arith.constant 0 : i32
    %10 = arith.cmpi ne, %9, %c0_i32_8 : i32
    scf.if %10 {
      %cst_25 = arith.constant 0.000000e+00 : f32
      %23 = vector.broadcast %cst_25 : f32 to vector<4x128xf32>
      %c0_26 = arith.constant 0 : index
      %c0_27 = arith.constant 0 : index
      %c0_28 = arith.constant 0 : index
      %c0_29 = arith.constant 0 : index
      %24 = vector.load %arg5[%c0_26, %c0_27, %c0_28, %c0_29] : memref<1x1x4x128xf32, #tpu.memory_space<vmem>>, vector<1x1x4x128xf32>
      %25 = vector.shape_cast %24 : vector<1x1x4x128xf32> to vector<4x128xf32>
      %26 = vector.shape_cast %23 : vector<4x128xf32> to vector<1x1x4x128xf32>
      tpu.vector_store %arg5[%c0_26, %c0_27, %c0_28, %c0_29], %26 {strides = array<i32>} : memref<1x1x4x128xf32, #tpu.memory_space<vmem>>, vector<1x1x4x128xf32>,
      %cst_30 = arith.constant 0.000000e+00 : f32
      %27 = vector.broadcast %cst_30 : f32 to vector<4x128xf32>
      %c0_31 = arith.constant 0 : index
      %c0_32 = arith.constant 0 : index
      %c0_33 = arith.constant 0 : index
      %c0_34 = arith.constant 0 : index
      %28 = vector.load %arg6[%c0_31, %c0_32, %c0_33, %c0_34] : memref<1x1x4x128xf32, #tpu.memory_space<vmem>>, vector<1x1x4x128xf32>
      %29 = vector.shape_cast %28 : vector<1x1x4x128xf32> to vector<4x128xf32>
      %30 = vector.shape_cast %27 : vector<4x128xf32> to vector<1x1x4x128xf32>
      tpu.vector_store %arg6[%c0_31, %c0_32, %c0_33, %c0_34], %30 {strides = array<i32>} : memref<1x1x4x128xf32, #tpu.memory_space<vmem>>, vector<1x1x4x128xf32>,
    } else {
    }
    %c0_9 = arith.constant 0 : index
    %c0_10 = arith.constant 0 : index
    %c0_11 = arith.constant 0 : index
    %c0_12 = arith.constant 0 : index
    %11 = vector.load %arg5[%c0_9, %c0_10, %c0_11, %c0_12] : memref<1x1x4x128xf32, #tpu.memory_space<vmem>>, vector<1x1x4x128xf32>
    %12 = vector.shape_cast %11 : vector<1x1x4x128xf32> to vector<4x128xf32>
    %13 = arith.addf %12, %5 : vector<4x128xf32>
    %c0_13 = arith.constant 0 : index
    %c0_14 = arith.constant 0 : index
    %c0_15 = arith.constant 0 : index
    %c0_16 = arith.constant 0 : index
    %14 = vector.load %arg5[%c0_13, %c0_14, %c0_15, %c0_16] : memref<1x1x4x128xf32, #tpu.memory_space<vmem>>, vector<1x1x4x128xf32>
    %15 = vector.shape_cast %14 : vector<1x1x4x128xf32> to vector<4x128xf32>
    %16 = vector.shape_cast %13 : vector<4x128xf32> to vector<1x1x4x128xf32>
    tpu.vector_store %arg5[%c0_13, %c0_14, %c0_15, %c0_16], %16 {strides = array<i32>} : memref<1x1x4x128xf32, #tpu.memory_space<vmem>>, vector<1x1x4x128xf32>,
    %c0_17 = arith.constant 0 : index
    %c0_18 = arith.constant 0 : index
    %c0_19 = arith.constant 0 : index
    %c0_20 = arith.constant 0 : index
    %17 = vector.load %arg6[%c0_17, %c0_18, %c0_19, %c0_20] : memref<1x1x4x128xf32, #tpu.memory_space<vmem>>, vector<1x1x4x128xf32>
    %18 = vector.shape_cast %17 : vector<1x1x4x128xf32> to vector<4x128xf32>
    %19 = arith.addf %18, %7 : vector<4x128xf32>
    %c0_21 = arith.constant 0 : index
    %c0_22 = arith.constant 0 : index
    %c0_23 = arith.constant 0 : index
    %c0_24 = arith.constant 0 : index
    %20 = vector.load %arg6[%c0_21, %c0_22, %c0_23, %c0_24] : memref<1x1x4x128xf32, #tpu.memory_space<vmem>>, vector<1x1x4x128xf32>
    %21 = vector.shape_cast %20 : vector<1x1x4x128xf32> to vector<4x128xf32>
    %22 = vector.shape_cast %19 : vector<4x128xf32> to vector<1x1x4x128xf32>
    tpu.vector_store %arg6[%c0_21, %c0_22, %c0_23, %c0_24], %22 {strides = array<i32>} : memref<1x1x4x128xf32, #tpu.memory_space<vmem>>, vector<1x1x4x128xf32>,
    return
  }
  func.func @transform_0(%arg0: i32, %arg1: i32, %arg2: i32) -> (i32, i32, i32, i32) {
    %c1_i32 = arith.constant 1 : i32
    %0 = arith.muli %arg1, %c1_i32 : i32
    %1 = arith.addi %0, %arg2 : i32
    %c0_i32 = arith.constant 0 : i32
    %c0_i32_0 = arith.constant 0 : i32
    %c0_i32_1 = arith.constant 0 : i32
    return %arg0, %c0_i32, %1, %c0_i32_0 : i32, i32, i32, i32
  }
  func.func @transform_1(%arg0: i32, %arg1: i32, %arg2: i32) -> (i32, i32, i32, i32) {
    %c1_i32 = arith.constant 1 : i32
    %0 = arith.muli %arg1, %c1_i32 : i32
    %1 = arith.addi %0, %arg2 : i32
    %c0_i32 = arith.constant 0 : i32
    %c0_i32_0 = arith.constant 0 : i32
    %c0_i32_1 = arith.constant 0 : i32
    return %arg0, %c0_i32, %1, %c0_i32_0 : i32, i32, i32, i32
  }
  func.func @transform_2(%arg0: i32, %arg1: i32, %arg2: i32) -> (i32, i32, i32, i32) {
    %c0_i32 = arith.constant 0 : i32
    %c0_i32_0 = arith.constant 0 : i32
    %c0_i32_1 = arith.constant 0 : i32
    return %arg0, %arg1, %c0_i32, %c0_i32_0 : i32, i32, i32, i32
  }
  func.func @transform_3(%arg0: i32, %arg1: i32, %arg2: i32) -> (i32, i32, i32, i32) {
    %c0_i32 = arith.constant 0 : i32
    %c0_i32_0 = arith.constant 0 : i32
    %c0_i32_1 = arith.constant 0 : i32
    return %arg0, %arg1, %c0_i32, %c0_i32_0 : i32, i32, i32, i32
  }
}

</mosaic_0001>

<llo_original>
// kernel: tpu_custom_call.1
$region0: #{tpu_custom_call.1}
  #allocation0 [shape = 'u32[]', space=smem, size = 0x4, offset = 0x4, fixed_abs, tag = 'smem constant byte address 0x4 - core index']
  #allocation1 [shape = 'u32[144,128]{1,0:T(1,128)}', space=vmem, size = 0x12000, scoped, tag = 'internal scratch']
  %s0 = inlined_call_operand.hbm [shape: f32[2,4,2,128], index: 0, kind: input, shape index: {}]
  %s1 = inlined_call_operand.hbm [shape: f32[2,4,2,128], index: 1, kind: input, shape index: {}]
  %s2 = inlined_call_operand.hbm [shape: f32[2,1,4,128], index: 2, kind: output, shape index: {0}]
  %s3 = inlined_call_operand.hbm [shape: f32[2,1,4,128], index: 3, kind: output, shape index: {1}]
  %4 = xla_tuple %s2, %s3
  %s5 = sld [smem:[#allocation0]]
  $region61: #{tpu_custom_call.1} parent=0
    _
  %s7 = ssub.s32 1, %s5
  %s8 = scalar_select 0, %s7, %s5
  $region1: #{tpu_custom_call.1} parent=0
    #allocation2 [shape = 'u8[8192]{0}', space=vmem, size = 0x2000, scoped, tag = 'input window, operand 0']
    #allocation3 [shape = 's32[2]{0}', space=sflag, size = 0x8, scoped, tag = 'scoped memory for tpu_custom_call.1']
    #allocation4 [shape = 's32[2]{0}', space=sflag, size = 0x8, scoped, tag = 'scoped memory for tpu_custom_call.1']
    #allocation5 [shape = 'u8[8192]{0}', space=vmem, size = 0x2000, scoped, tag = 'input window, operand 1']
    #allocation6 [shape = 's32[2]{0}', space=sflag, size = 0x8, scoped, tag = 'scoped memory for tpu_custom_call.1']
    #allocation7 [shape = 'u8[4096]{0}', space=vmem, size = 0x1000, scoped, tag = 'output window, operand 0']
    #allocation8 [shape = 'u8[4096]{0}', space=vmem, size = 0x1000, scoped, tag = 'output window, operand 1']
    #allocation9 [shape = 's32[2]{0}', space=sflag, size = 0x8, scoped, tag = 'scoped memory for tpu_custom_call.1']
    %9 = vsyncpa [#allocation3], 0
    %s10 = scalar_lea.sflag [#allocation3], 1
    %11 = vsyncpa %s10, 0
    %12 = vsyncpa [#allocation6], 0
    %s13 = scalar_lea.sflag [#allocation6], 1
    %14 = vsyncpa %s13, 0
    %15 = vsyncpa [#allocation4], 0
    %s16 = scalar_lea.sflag [#allocation4], 1
    %17 = vsyncpa %s16, 0
    %18 = vsyncpa [#allocation9], 0
    %s19 = scalar_lea.sflag [#allocation9], 1
    %20 = vsyncpa %s19, 0
    loop: start=0, step=1, limit=4
    $region2: #{tpu_custom_call.1} parent=1 // loop_pre_header
      _
    $region3: #{tpu_custom_call.1} parent=1 // loop_header
      %s22 = sphi 0, %s26
      %p23 = scmp.ge.s32.totalorder %s22, 4
      %s29 = sphi 0, %s48
      %s30 = sphi 0, %s44
      %s31 = sphi 0, %s40
      %s32 = sphi 0, %s29
      %s33 = sphi 0, %s30
      %s34 = sphi 0, %s31
      %s35 = sphi 0, %s32
      %s36 = sphi 0, %s33
      %s37 = sphi 0, %s34
      %s55 = sphi 0, %s57
      %s58 = sphi 0, %s55
      %s59 = sphi 0, %s58
      %s75 = sphi 0, %s59
      %s85 = sphi 0, %s87
      %s88 = sphi 0, %s85
      %s89 = sphi 0, %s88
      %s105 = sphi 0, %s89
      %s113 = sphi 0, %s115
      %s116 = sphi 0, %s113
      %s117 = sphi 0, %s116
      %s133 = sphi 0, %s117
      %s141 = sphi 0, %s143
      %s144 = sphi 0, %s141
      %s145 = sphi 0, %s144
      %s161 = sphi 0, %s145
    $region4: #{tpu_custom_call.1} parent=1 // loop_header_branch
      %25 = sbr.rel (%p23) target = $region8
    $region5: #{tpu_custom_call.1} parent=1 // loop_body
      %s27 = ssub.s32 %s22, 1
      %s28 = ssub.s32 %s22, 2
      %s38 = sadd.s32 1, %s31
      %p39 = scmp.ge.s32.totalorder %s38, 1
      %s40 = scalar_select %p39, 0, %s38
      %s41 = sadd.s32 1, %s30
      %s42 = scalar_select %p39, %s41, %s30
      %p43 = scmp.ge.s32.totalorder %s42, 1
      %s44 = scalar_select %p43, 0, %s42
      %s45 = sadd.s32 1, %s29
      %s46 = scalar_select %p43, %s45, %s29
      %p47 = scmp.ge.s32.totalorder %s46, 2
      %s48 = scalar_select %p47, 0, %s46
      %s49 = sadd.s32 %s30, %s31
      %s50 = sadd.s32 %s44, %s40
      %s51 = ssub.s32 %s29, %s48
      %s52 = ssub.s32 %s49, %s50
      %s53 = sor.u32 %s51, %s52
      %p54 = scmp.eq.s32.totalorder %s53, 0
      %s56 = sadd.s32 %s55, 1
      %s57 = scalar_select %p54, %s55, %s56
      %p60 = pneg %p54
      %p61 = scmp.eq.s32.totalorder %s22, 1
      %p62 = por %p60, %p61
      %p63 = scmp.ne.s32.totalorder %s55, %s58
      %p64 = scmp.eq.s32.totalorder %s22, 0
      %p65 = por %p63, %p64
      %p66 = scmp.ne.s32.totalorder %s55, %s58
      %p67 = scmp.eq.s32.totalorder %s27, 1
      %p68 = por %p66, %p67
      %p69 = scmp.ne.s32.totalorder %s58, %s59
      %p70 = scmp.eq.s32.totalorder %s27, 0
      %p71 = por %p69, %p70
      %p72 = scmp.ne.s32.totalorder %s58, %s59
      %p73 = scmp.eq.s32.totalorder %s28, 1
      %p74 = por %p72, %p73
      %p76 = scmp.ne.s32.totalorder %s59, %s75
      %p77 = scmp.eq.s32.totalorder %s28, 0
      %p78 = por %p76, %p77
      %s79 = sadd.s32 %s30, %s31
      %s80 = sadd.s32 %s44, %s40
      %s81 = ssub.s32 %s29, %s48
      %s82 = ssub.s32 %s79, %s80
      %s83 = sor.u32 %s81, %s82
      %p84 = scmp.eq.s32.totalorder %s83, 0
      %s86 = sadd.s32 %s85, 1
      %s87 = scalar_select %p84, %s85, %s86
      %p90 = pneg %p84
      %p91 = scmp.eq.s32.totalorder %s22, 1
      %p92 = por %p90, %p91
      %p93 = scmp.ne.s32.totalorder %s85, %s88
      %p94 = scmp.eq.s32.totalorder %s22, 0
      %p95 = por %p93, %p94
      %p96 = scmp.ne.s32.totalorder %s85, %s88
      %p97 = scmp.eq.s32.totalorder %s27, 1
      %p98 = por %p96, %p97
      %p99 = scmp.ne.s32.totalorder %s88, %s89
      %p100 = scmp.eq.s32.totalorder %s27, 0
      %p101 = por %p99, %p100
      %p102 = scmp.ne.s32.totalorder %s88, %s89
      %p103 = scmp.eq.s32.totalorder %s28, 1
      %p104 = por %p102, %p103
      %p106 = scmp.ne.s32.totalorder %s89, %s105
      %p107 = scmp.eq.s32.totalorder %s28, 0
      %p108 = por %p106, %p107
      %s109 = ssub.s32 %s29, %s48
      %s110 = ssub.s32 %s30, %s44
      %s111 = sor.u32 %s109, %s110
      %p112 = scmp.eq.s32.totalorder %s111, 0
      %s114 = sadd.s32 %s113, 1
      %s115 = scalar_select %p112, %s113, %s114
      %p118 = pneg %p112
      %p119 = scmp.eq.s32.totalorder %s22, 1
      %p120 = por %p118, %p119
      %p121 = scmp.ne.s32.totalorder %s113, %s116
      %p122 = scmp.eq.s32.totalorder %s22, 0
      %p123 = por %p121, %p122
      %p124 = scmp.ne.s32.totalorder %s113, %s116
      %p125 = scmp.eq.s32.totalorder %s27, 1
      %p126 = por %p124, %p125
      %p127 = scmp.ne.s32.totalorder %s116, %s117
      %p128 = scmp.eq.s32.totalorder %s27, 0
      %p129 = por %p127, %p128
      %p130 = scmp.ne.s32.totalorder %s116, %s117
      %p131 = scmp.eq.s32.totalorder %s28, 1
      %p132 = por %p130, %p131
      %p134 = scmp.ne.s32.totalorder %s117, %s133
      %p135 = scmp.eq.s32.totalorder %s28, 0
      %p136 = por %p134, %p135
      %s137 = ssub.s32 %s29, %s48
      %s138 = ssub.s32 %s30, %s44
      %s139 = sor.u32 %s137, %s138
      %p140 = scmp.eq.s32.totalorder %s139, 0
      %s142 = sadd.s32 %s141, 1
      %s143 = scalar_select %p140, %s141, %s142
      %p146 = pneg %p140
      %p147 = scmp.eq.s32.totalorder %s22, 1
      %p148 = por %p146, %p147
      %p149 = scmp.ne.s32.totalorder %s141, %s144
      %p150 = scmp.eq.s32.totalorder %s22, 0
      %p151 = por %p149, %p150
      %p152 = scmp.ne.s32.totalorder %s141, %s144
      %p153 = scmp.eq.s32.totalorder %s27, 1
      %p154 = por %p152, %p153
      %p155 = scmp.ne.s32.totalorder %s144, %s145
      %p156 = scmp.eq.s32.totalorder %s27, 0
      %p157 = por %p155, %p156
      %p158 = scmp.ne.s32.totalorder %s144, %s145
      %p159 = scmp.eq.s32.totalorder %s28, 1
      %p160 = por %p158, %p159
      %p162 = scmp.ne.s32.totalorder %s145, %s161
      %p163 = scmp.eq.s32.totalorder %s28, 0
      %p164 = por %p162, %p163
      %p165 = scmp.le.s32.totalorder 1, %s22
      %p166 = scmp.lt.s32.totalorder %s22, 3
      %p167 = pnand %p165, %p166
      %p168 = pneg %p167
      // Predicated region
      $region9: #{tpu_custom_call.1} parent=5 // pred_check
        _
      $region10: #{tpu_custom_call.1} parent=5 // pred_check_branch
        %170 = sbr.rel (%p167) target = $region12
      $region11: #{tpu_custom_call.1} parent=5 // pred_region
        %s171 = ssub.s32 %s22, 1
      $region12: #{tpu_custom_call.1} parent=5 // pred_fallthru
        _
      %p172 = scmp.lt.s32.totalorder %s22, 2
      // Predicated region
      $region13: #{tpu_custom_call.1} parent=5 // pred_check
        %p173 = pneg %p172
      $region14: #{tpu_custom_call.1} parent=5 // pred_check_branch
        %175 = sbr.rel (%p173) target = $region16
      $region15: #{tpu_custom_call.1} parent=5 // pred_region
        // Predicated region
        $region17: #{tpu_custom_call.1} parent=15 // pred_check
          %p176 = pneg %p65
        $region18: #{tpu_custom_call.1} parent=15 // pred_check_branch
          %178 = sbr.rel (%p176) target = $region20
        $region19: #{tpu_custom_call.1} parent=15 // pred_region
          %s179 = sand.u32 %s55, 1
          %s180 = scalar_lea.sflag [#allocation3], %s179
          %s181 = sand.u32 %s55, 1
          %s182 = smul.addr %s181, 8
          %s183 = scalar_lea.vmem [#allocation2], %s182
          %s184 = sadd.s32 %s30, %s31
          %s186 = ssub.s32 128, 128
          %187 = vsyncadd %s180, %s186
          %s188 = smul.addr %s29, 4
          %s189 = sadd.s32 %s184, %s188
          %s190 = smul.addr %s189, 32
          %s191 = scalar_lea.hbm %s0, %s190
          %s192 = sshll.u32 %s183, 4
          %s193 = int_to_ptr.vmem [resolvable:$true] %s192
          %198 = dma.hbm_to_vmem [thread:$0]  %s191, 128, %s193, %s180, 32, 32, 2
        $region20: #{tpu_custom_call.1} parent=15 // pred_fallthru
          _
        // Predicated region
        $region21: #{tpu_custom_call.1} parent=15 // pred_check
          %p199 = pneg %p95
        $region22: #{tpu_custom_call.1} parent=15 // pred_check_branch
          %201 = sbr.rel (%p199) target = $region24
        $region23: #{tpu_custom_call.1} parent=15 // pred_region
          %s202 = sand.u32 %s85, 1
          %s203 = scalar_lea.sflag [#allocation6], %s202
          %s204 = sand.u32 %s85, 1
          %s205 = smul.addr %s204, 8
          %s206 = scalar_lea.vmem [#allocation5], %s205
          %s207 = sadd.s32 %s30, %s31
          %s209 = ssub.s32 128, 128
          %210 = vsyncadd %s203, %s209
          %s211 = smul.addr %s29, 4
          %s212 = sadd.s32 %s207, %s211
          %s213 = smul.addr %s212, 32
          %s214 = scalar_lea.hbm %s1, %s213
          %s215 = sshll.u32 %s206, 4
          %s216 = int_to_ptr.vmem [resolvable:$true] %s215
          %221 = dma.hbm_to_vmem [thread:$0]  %s214, 128, %s216, %s203, 32, 32, 2
        $region24: #{tpu_custom_call.1} parent=15 // pred_fallthru
          _
      $region16: #{tpu_custom_call.1} parent=5 // pred_fallthru
        _
      %p222 = scmp.le.s32.totalorder 1, %s22
      %p223 = scmp.lt.s32.totalorder %s22, 3
      %p224 = pnand %p222, %p223
      %p225 = pneg %p224
      // Predicated region
      $region25: #{tpu_custom_call.1} parent=5 // pred_check
        _
      $region26: #{tpu_custom_call.1} parent=5 // pred_check_branch
        %227 = sbr.rel (%p224) target = $region28
      $region27: #{tpu_custom_call.1} parent=5 // pred_region
        %s228 = ssub.s32 %s22, 1
        %s229 = sand.u32 %s58, 1
        %s230 = scalar_lea.sflag [#allocation3], %s229
        %s231 = sand.u32 %s58, 1
        %s232 = smul.addr %s231, 8
        %s233 = scalar_lea.vmem [#allocation2], %s232
        // Predicated region
        $region29: #{tpu_custom_call.1} parent=27 // pred_check
          %p234 = pneg %p71
        $region30: #{tpu_custom_call.1} parent=27 // pred_check_branch
          %236 = sbr.rel (%p234) target = $region32
        $region31: #{tpu_custom_call.1} parent=27 // pred_region
          %237 = dma.done %s230, 128
        $region32: #{tpu_custom_call.1} parent=27 // pred_fallthru
          _
        %s238 = sand.u32 %s88, 1
        %s239 = scalar_lea.sflag [#allocation6], %s238
        %s240 = sand.u32 %s88, 1
        %s241 = smul.addr %s240, 8
        %s242 = scalar_lea.vmem [#allocation5], %s241
        // Predicated region
        $region33: #{tpu_custom_call.1} parent=27 // pred_check
          %p243 = pneg %p101
        $region34: #{tpu_custom_call.1} parent=27 // pred_check_branch
          %245 = sbr.rel (%p243) target = $region36
        $region35: #{tpu_custom_call.1} parent=27 // pred_region
          %246 = dma.done %s239, 128
        $region36: #{tpu_custom_call.1} parent=27 // pred_fallthru
          _
        %s247 = sand.u32 %s58, 1
        %s248 = scalar_lea.sflag [#allocation3], %s247
        %s249 = sand.u32 %s58, 1
        %s250 = smul.addr %s249, 8
        %s251 = scalar_lea.vmem [#allocation2], %s250
        %p252 = pneg %p71
        %p253 = pneg %p68
        %s254 = sand.u32 %s88, 1
        %s255 = scalar_lea.sflag [#allocation6], %s254
        %s256 = sand.u32 %s88, 1
        %s257 = smul.addr %s256, 8
        %s258 = scalar_lea.vmem [#allocation5], %s257
        %p259 = pneg %p101
        %p260 = pneg %p98
        %p261 = pneg %p129
        %p262 = pneg %p126
        %s263 = sand.u32 %s116, 1
        %s264 = scalar_lea.sflag [#allocation4], %s263
        %s265 = sand.u32 %s116, 1
        %s266 = smul.addr %s265, 4
        %s267 = scalar_lea.vmem [#allocation7], %s266
        %p268 = pneg %p157
        %p269 = pneg %p154
        %s270 = sand.u32 %s144, 1
        %s271 = scalar_lea.sflag [#allocation9], %s270
        %s272 = sand.u32 %s144, 1
        %s273 = smul.addr %s272, 4
        %s274 = scalar_lea.vmem [#allocation8], %s273
        %s275 = sadd.s32 %s33, %s34
        %s276 = sadd.s32 %s33, %s34
        %v277 = vld [vmem:[%s233] sm:$0x3]
        %v278 = vld [vmem:[%s233 + $0x2] sm:$0x3]
        %v279 = vld [vmem:[%s233 + $0x4] sm:$0x3]
        %v280 = vld [vmem:[%s233 + $0x6] sm:$0x3]
        %v281 = vld [vmem:[%s242] sm:$0x3]
        %v282 = vld [vmem:[%s242 + $0x2] sm:$0x3]
        %v283 = vld [vmem:[%s242 + $0x4] sm:$0x3]
        %v284 = vld [vmem:[%s242 + $0x6] sm:$0x3]
        %v285 = vmul.f32 %v281, %v277
        %v286 = vmul.f32 %v282, %v278
        %v287 = vmul.f32 %v283, %v279
        %v288 = vmul.f32 %v284, %v280
        %vm289 = vcmask 1041408
        %v290 = vsel %vm289, %v285, 0.0
        %v291 = vrot.slane %v290, 4
        %v292 = vadd.f32 %v290, %v291
        %v293 = vrot.slane %v292, 2
        %v294 = vadd.f32 %v292, %v293
        %v295 = vrot.slane %v294, 1
        %v296 = vadd.f32 %v294, %v295
        %v297 = vsel %vm289, %v286, 0.0
        %v298 = vrot.slane %v297, 4
        %v299 = vadd.f32 %v297, %v298
        %v300 = vrot.slane %v299, 2
        %v301 = vadd.f32 %v299, %v300
        %v302 = vrot.slane %v301, 1
        %v303 = vadd.f32 %v301, %v302
        %v304 = vsel %vm289, %v287, 0.0
        %v305 = vrot.slane %v304, 4
        %v306 = vadd.f32 %v304, %v305
        %v307 = vrot.slane %v306, 2
        %v308 = vadd.f32 %v306, %v307
        %v309 = vrot.slane %v308, 1
        %v310 = vadd.f32 %v308, %v309
        %v311 = vsel %vm289, %v288, 0.0
        %v312 = vrot.slane %v311, 4
        %v313 = vadd.f32 %v311, %v312
        %v314 = vrot.slane %v313, 2
        %v315 = vadd.f32 %v313, %v314
        %v316 = vrot.slane %v315, 1
        %v317 = vadd.f32 %v315, %v316
        %v318 = vadd.f32 %v281, %v277
        %v319 = vadd.f32 %v282, %v278
        %v320 = vadd.f32 %v283, %v279
        %v321 = vadd.f32 %v284, %v280
        %v322 = vsel %vm289, %v318, 0.0
        %v323 = vrot.slane %v322, 4
        %v324 = vadd.f32 %v322, %v323
        %v325 = vrot.slane %v324, 2
        %v326 = vadd.f32 %v324, %v325
        %v327 = vrot.slane %v326, 1
        %v328 = vadd.f32 %v326, %v327
        %v329 = vsel %vm289, %v319, 0.0
        %v330 = vrot.slane %v329, 4
        %v331 = vadd.f32 %v329, %v330
        %v332 = vrot.slane %v331, 2
        %v333 = vadd.f32 %v331, %v332
        %v334 = vrot.slane %v333, 1
        %v335 = vadd.f32 %v333, %v334
        %v336 = vsel %vm289, %v320, 0.0
        %v337 = vrot.slane %v336, 4
        %v338 = vadd.f32 %v336, %v337
        %v339 = vrot.slane %v338, 2
        %v340 = vadd.f32 %v338, %v339
        %v341 = vrot.slane %v340, 1
        %v342 = vadd.f32 %v340, %v341
        %v343 = vsel %vm289, %v321, 0.0
        %v344 = vrot.slane %v343, 4
        %v345 = vadd.f32 %v343, %v344
        %v346 = vrot.slane %v345, 2
        %v347 = vadd.f32 %v345, %v346
        %v348 = vrot.slane %v347, 1
        %v349 = vadd.f32 %v347, %v348
        %p350 = scmp.eq.s32.totalorder %s34, 0
        // Predicated region
        $region37: #{tpu_custom_call.1} parent=27 // pred_check
          %p351 = pneg %p350
        $region38: #{tpu_custom_call.1} parent=27 // pred_check_branch
          %353 = sbr.rel (%p351) target = $region40
        $region39: #{tpu_custom_call.1} parent=27 // pred_region
          %354 = vst [vmem:[%s267] sm:$0xf] 0.0
          %355 = vst [vmem:[%s274] sm:$0xf] 0.0
        $region40: #{tpu_custom_call.1} parent=27 // pred_fallthru
          _
        %v356 = vld [vmem:[%s267] sm:$0xf]
        %vm361 = vcmask 1041409
        %v362 = vsel %vm361, %v303, %v296
        %vm363 = vcmask 1042434
        %v364 = vsel %vm363, %v310, %v362
        %vm365 = vcmask 1043459
        %v366 = vsel %vm365, %v317, %v364
        %v368 = vadd.f32 %v356, %v366
        %369 = vst [vmem:[%s267] sm:$0xf] %v368
        %v370 = vld [vmem:[%s274] sm:$0xf]
        %v375 = vsel %vm361, %v335, %v328
        %v376 = vsel %vm363, %v342, %v375
        %v377 = vsel %vm365, %v349, %v376
        %v379 = vadd.f32 %v370, %v377
        %380 = vst [vmem:[%s274] sm:$0xf] %v379
        %s381 = sand.u32 %s116, 1
        %s382 = scalar_lea.sflag [#allocation4], %s381
        %s383 = sand.u32 %s116, 1
        %s384 = smul.addr %s383, 4
        %s385 = scalar_lea.vmem [#allocation7], %s384
        %s386 = sand.u32 %s144, 1
        %s387 = scalar_lea.sflag [#allocation9], %s386
        %s388 = sand.u32 %s144, 1
        %s389 = smul.addr %s388, 4
        %s390 = scalar_lea.vmem [#allocation8], %s389
        // Predicated region
        $region41: #{tpu_custom_call.1} parent=27 // pred_check
          %p391 = pneg %p126
        $region42: #{tpu_custom_call.1} parent=27 // pred_check_branch
          %393 = sbr.rel (%p391) target = $region44
        $region43: #{tpu_custom_call.1} parent=27 // pred_region
          %s395 = ssub.s32 64, 64
          %396 = vsyncadd %s382, %s395
          %s397 = sadd.s32 %s33, %s32
          %s398 = smul.addr %s397, 64
          %s399 = scalar_lea.hbm %s2, %s398
          %s401 = sshll.u32 %s385, 4
          %s402 = int_to_ptr.vmem [resolvable:$true] %s401
          %404 = dma.vmem_to_hbm [thread:$0]  %s402, 64, %s399, %s382
        $region44: #{tpu_custom_call.1} parent=27 // pred_fallthru
          _
        // Predicated region
        $region45: #{tpu_custom_call.1} parent=27 // pred_check
          %p405 = pneg %p154
        $region46: #{tpu_custom_call.1} parent=27 // pred_check_branch
          %407 = sbr.rel (%p405) target = $region48
        $region47: #{tpu_custom_call.1} parent=27 // pred_region
          %s409 = ssub.s32 64, 64
          %410 = vsyncadd %s387, %s409
          %s411 = sadd.s32 %s33, %s32
          %s412 = smul.addr %s411, 64
          %s413 = scalar_lea.hbm %s3, %s412
          %s415 = sshll.u32 %s390, 4
          %s416 = int_to_ptr.vmem [resolvable:$true] %s415
          %418 = dma.vmem_to_hbm [thread:$0]  %s416, 64, %s413, %s387
        $region48: #{tpu_custom_call.1} parent=27 // pred_fallthru
          _
      $region28: #{tpu_custom_call.1} parent=5 // pred_fallthru
        _
      %p419 = scmp.le.s32.totalorder 2, %s22
      // Predicated region
      $region49: #{tpu_custom_call.1} parent=5 // pred_check
        %p420 = pneg %p419
      $region50: #{tpu_custom_call.1} parent=5 // pred_check_branch
        %422 = sbr.rel (%p420) target = $region52
      $region51: #{tpu_custom_call.1} parent=5 // pred_region
        %s423 = ssub.s32 %s22, 2
        // Predicated region
        $region53: #{tpu_custom_call.1} parent=51 // pred_check
          %p424 = pneg %p132
        $region54: #{tpu_custom_call.1} parent=51 // pred_check_branch
          %426 = sbr.rel (%p424) target = $region56
        $region55: #{tpu_custom_call.1} parent=51 // pred_region
          %s427 = sand.u32 %s117, 1
          %s428 = scalar_lea.sflag [#allocation4], %s427
          %s429 = sand.u32 %s117, 1
          %s430 = smul.addr %s429, 4
          %s431 = scalar_lea.vmem [#allocation7], %s430
          %432 = dma.done %s428, 64
        $region56: #{tpu_custom_call.1} parent=51 // pred_fallthru
          _
        // Predicated region
        $region57: #{tpu_custom_call.1} parent=51 // pred_check
          %p433 = pneg %p160
        $region58: #{tpu_custom_call.1} parent=51 // pred_check_branch
          %435 = sbr.rel (%p433) target = $region60
        $region59: #{tpu_custom_call.1} parent=51 // pred_region
          %s436 = sand.u32 %s145, 1
          %s437 = scalar_lea.sflag [#allocation9], %s436
          %s438 = sand.u32 %s145, 1
          %s439 = smul.addr %s438, 4
          %s440 = scalar_lea.vmem [#allocation8], %s439
          %441 = dma.done %s437, 64
        $region60: #{tpu_custom_call.1} parent=51 // pred_fallthru
          _
      $region52: #{tpu_custom_call.1} parent=5 // pred_fallthru
        _
    $region6: #{tpu_custom_call.1} parent=1 // loop_footer
      %s26 = sadd.s32 1, %s22
    $region7: #{tpu_custom_call.1} parent=1 // loop_footer_branch
      %21 = sbr.rel target = $region3
    $region8: #{tpu_custom_call.1} parent=1 // loop_exit
      _
    %442 = vsyncpa [#allocation3], 1
    %s443 = scalar_lea.sflag [#allocation3], 1
    %444 = vsyncpa %s443, 1
    %445 = vsyncpa [#allocation6], 1
    %s446 = scalar_lea.sflag [#allocation6], 1
    %447 = vsyncpa %s446, 1
    %448 = vsyncpa [#allocation4], 1
    %s449 = scalar_lea.sflag [#allocation4], 1
    %450 = vsyncpa %s449, 1
    %451 = vsyncpa [#allocation9], 1
    %s452 = scalar_lea.sflag [#allocation9], 1
    %453 = vsyncpa %s452, 1

</llo_original>
